<compile_context>
chip_gen: v7x
topology: tpu7x:2x2x1
jax: 0.10.0
libtpu: 0.0.40
codegen_flags: <defaults>
</compile_context>

<pallas_src>
import functools

import jax
import jax.numpy as jnp
from jax import lax
from jax.experimental import pallas as pl
from jax.experimental.pallas import tpu as pltpu


def _round_up(n, m):
    return ((n + m - 1) // m) * m


def perceptron_kernel(x_ref, w_ref, b_ref, o_ref):
    # x_ref: (TB, D) f32 -- natural-layout batch tile (D is the full feature dim)
    # w_ref: (8, D)  f32 -- weight row replicated over 8 sublanes (MXU-friendly M)
    # b_ref: (1, 1)  f32 -- scalar bias in SMEM
    # o_ref: (1, TB) f32 -- lane-dense output block (batch on the 128-lane axis)
    #
    # (8, D) x (TB, D) contracted on D -> (8, TB): same MXU "NT" pattern as
    # q @ k.T in flash attention; the batch lands on the output lane axis for free.
    logits = lax.dot_general(
        w_ref[...],
        x_ref[...],
        dimension_numbers=(((1,), (1,)), ((), ())),
        preferred_element_type=jnp.float32,
    )
    o_ref[...] = jax.nn.sigmoid(logits[0:1, :] + b_ref[0, 0]).astype(o_ref.dtype)


@functools.partial(jax.jit, static_argnames=("max_tb",))
def perceptron_forward(x, w, b, *, max_tb=16384):
    """x: (B, D) f32, w: (D, 1) f32 (= fc1.weight.T), b: (1, 1) f32 -> (B,) f32."""
    B, D = x.shape
    x = x.astype(jnp.float32)

    # Batch tile (lanes of the output block):
    #   * a multiple of 128 so the (1, TB) output block satisfies the lane rule,
    #   * aimed at >=2 grid steps so both v7x TensorCores share the work,
    #   * capped by max_tb: a (TB, 32) f32 block is lane-padded to (TB, 128) in
    #     VMEM, i.e. TB*512 B per buffer; TB=16384 -> 16 MiB double-buffered.
    tb = min(max_tb, _round_up(pl.cdiv(B, 2), 128))
    if tb > B:
        tb = B  # single block covering the whole (possibly tiny/ragged) batch
    grid = (pl.cdiv(B, tb),)

    # Tiny (8, D) operand: weight row replicated across 8 sublanes.
    w8 = jnp.broadcast_to(jnp.reshape(w.astype(jnp.float32), (1, D)), (8, D))

    out = pl.pallas_call(
        perceptron_kernel,
        out_shape=jax.ShapeDtypeStruct((1, B), jnp.float32),
        grid=grid,
        in_specs=[
            pl.BlockSpec((tb, D), lambda i: (i, 0)),             # natural x tile
            pl.BlockSpec((8, D), lambda i: (0, 0)),              # resident weights
            pl.BlockSpec(memory_space=pltpu.MemorySpace.SMEM),   # scalar bias
        ],
        out_specs=pl.BlockSpec((1, tb), lambda i: (0, i)),       # lane-dense output
        compiler_params=pltpu.CompilerParams(
            dimension_semantics=("parallel",),   # megacore-shard batch on v7x
            vmem_limit_bytes=32 * 1024 * 1024,
        ),
        cost_estimate=pl.CostEstimate(
            flops=2 * B * D,
            transcendentals=B,
            bytes_accessed=B * D * 4 + D * 4 + B * 4,
        ),
    )(x, w8, b.astype(jnp.float32))

    # torch: sigmoid(fc1(x)).squeeze() -> (B,).
    # (For batch==1 torch would squeeze to a 0-d tensor; we keep shape (B,).)
    return out[0]


if __name__ == "__main__":
    key = jax.random.PRNGKey(0)
    k_x, k_w, k_b, k_x2 = jax.random.split(key, 4)

    batch, input_dim = 2, 32

    # Deterministic example input (x_in: (batch, num_features)).
    x = jax.random.normal(k_x, (batch, input_dim), dtype=jnp.float32)

    # nn.Linear default init: U(-1/sqrt(in_features), 1/sqrt(in_features)).
    bound = 1.0 / jnp.sqrt(jnp.float32(input_dim))
    w = jax.random.uniform(k_w, (input_dim, 1), dtype=jnp.float32,
                           minval=-bound, maxval=bound)
    b = jax.random.uniform(k_b, (1, 1), dtype=jnp.float32,
                           minval=-bound, maxval=bound)

    def reference(xx):
        # Pure-VPU f32 reference. Tolerance is 2e-3 because the in-kernel MXU
        # contraction (default precision) may use bf16-pass decomposition.
        return jax.nn.sigmoid(jnp.sum(xx * w[:, 0], axis=1) + b[0, 0])

    y = perceptron_forward(x, w, b)
    jax.block_until_ready(y)
    assert y.shape == (batch,)
    assert jnp.allclose(y, reference(x), atol=2e-3, rtol=1e-3)

    # Multi-step grid with a ragged (partial) trailing block: B=300 -> TB=256, grid=2.
    batch2 = 300
    x2 = jax.random.normal(k_x2, (batch2, input_dim), dtype=jnp.float32)
    y2 = perceptron_forward(x2, w, b)
    jax.block_until_ready(y2)
    assert y2.shape == (batch2,)
    assert jnp.allclose(y2, reference(x2), atol=2e-3, rtol=1e-3)

    # Same batch with a small forced tile: TB=128, grid=3 (exercises >2 steps).
    y3 = perceptron_forward(x2, w, b, max_tb=128)
    jax.block_until_ready(y3)
    assert y3.shape == (batch2,)
    assert jnp.allclose(y3, reference(x2), atol=2e-3, rtol=1e-3)

    print("KERNEL_OK")
</pallas_src>

<mosaic_0001>
module attributes {stable_mosaic.version = 11 : i64} {
  func.func @perceptron_kernel(%arg0: i32, %arg1: memref<2x32xf32, #tpu.memory_space<vmem>>, %arg2: memref<8x32xf32, #tpu.memory_space<vmem>>, %arg3: memref<1x1xf32, #tpu.memory_space<smem>>, %arg4: memref<1x2xf32, #tpu.memory_space<vmem>>) attributes {dimension_semantics = [#tpu.dimension_semantics<parallel>], iteration_bounds = array<i64: 1>, scalar_prefetch = 0 : i64, scratch_operands = 0 : i64, tpu.core_type = #tpu.core_type<tc>, window_params = [{transform_indices = @transform_0, window_bounds = array<i64: 2, 32>}, {pipeline_mode = #tpu.pipeline_mode<synchronous>, transform_indices = @transform_1, window_bounds = array<i64: 8, 32>}, {transform_indices = @transform_2, window_bounds = array<i64: 1, 1>}, {transform_indices = @transform_3, window_bounds = array<i64: 1, 2>}]} {
    %c0 = arith.constant 0 : index
    %c0_0 = arith.constant 0 : index
    %0 = vector.load %arg2[%c0, %c0_0] : memref<8x32xf32, #tpu.memory_space<vmem>>, vector<8x32xf32>
    %c0_1 = arith.constant 0 : index
    %c0_2 = arith.constant 0 : index
    %1 = vector.load %arg1[%c0_1, %c0_2] : memref<2x32xf32, #tpu.memory_space<vmem>>, vector<2x32xf32>
    %cst = arith.constant dense<0.000000e+00> : vector<8x2xf32>
    %2 = tpu.matmul %0, %1, %cst {dimension_numbers = #tpu.dot_dimension_numbers<[1], [1], [0], [0], [0, 0, 1, 0], [], []>} : vector<8x32xf32>, vector<2x32xf32>, vector<8x2xf32> -> vector<8x2xf32>
    %3 = vector.extract_strided_slice %2 {offsets = [0, 0], sizes = [1, 2], strides = [1, 1]} : vector<8x2xf32> to vector<1x2xf32>
    %c0_3 = arith.constant 0 : index
    %c0_4 = arith.constant 0 : index
    %4 = memref.load %arg3[%c0_3, %c0_4] : memref<1x1xf32, #tpu.memory_space<smem>>
    %5 = vector.broadcast %4 : f32 to vector<1x2xf32>
    %6 = arith.addf %3, %5 : vector<1x2xf32>
    %7 = arith.negf %6 : vector<1x2xf32>
    %8 = math.exp %7 : vector<1x2xf32>
    %cst_5 = arith.constant 1.000000e+00 : f32
    %9 = vector.broadcast %cst_5 : f32 to vector<1x2xf32>
    %10 = arith.addf %9, %8 : vector<1x2xf32>
    %11 = arith.divf %9, %10 : vector<1x2xf32>
    %c0_6 = arith.constant 0 : index
    %c0_7 = arith.constant 0 : index
    %12 = vector.load %arg4[%c0_6, %c0_7] : memref<1x2xf32, #tpu.memory_space<vmem>>, vector<1x2xf32>
    tpu.vector_store %arg4[%c0_6, %c0_7], %11 {strides = array<i32>} : memref<1x2xf32, #tpu.memory_space<vmem>>, vector<1x2xf32>,
    return
  }
  func.func @transform_0(%arg0: i32) -> (i32, i32) {
    %c0_i32 = arith.constant 0 : i32
    %c0_i32_0 = arith.constant 0 : i32
    return %arg0, %c0_i32 : i32, i32
  }
  func.func @transform_1(%arg0: i32) -> (i32, i32) {
    %c0_i32 = arith.constant 0 : i32
    %c0_i32_0 = arith.constant 0 : i32
    %c0_i32_1 = arith.constant 0 : i32
    return %c0_i32, %c0_i32_0 : i32, i32
  }
  func.func @transform_2(%arg0: i32) -> (i32, i32) {
    %c0_i32 = arith.constant 0 : i32
    %c0_i32_0 = arith.constant 0 : i32
    %c0_i32_1 = arith.constant 0 : i32
    return %c0_i32, %c0_i32_0 : i32, i32
  }
  func.func @transform_3(%arg0: i32) -> (i32, i32) {
    %c0_i32 = arith.constant 0 : i32
    %c0_i32_0 = arith.constant 0 : i32
    return %c0_i32, %arg0 : i32, i32
  }
}

</mosaic_0001>

<llo_original>
// kernel: perceptron_forward.1
$region0: #{perceptron_forward.1}
  #allocation0 [shape = 'u32[]', space=smem, size = 0x4, offset = 0x4, fixed_abs, tag = 'smem constant byte address 0x4 - core index']
  #allocation1 [shape = 'u32[144,128]{1,0:T(1,128)}', space=vmem, size = 0x12000, scoped, tag = 'internal scratch']
  #allocation2 [shape = 'f32[1,1]{1,0:T(1,128)S(6)}', space=smem, size = 0x200, scoped, tag = 'scoped memory for perceptron_forward.1']
  %s0 = inlined_call_operand.vmem [shape: f32[2,32], index: 0, kind: input, shape index: {}]
  %s1 = inlined_call_operand.vmem [shape: f32[8,32], index: 1, kind: input, shape index: {}]
  %s2 = inlined_call_operand.<no memory space> [shape: f32[1,1], index: 2, kind: input, shape index: {}]
  %s3 = inlined_call_operand.hbm [shape: f32[1,2], index: 3, kind: output, shape index: {}]
  %s4 = sld [smem:[#allocation0]]
  $region22: #{perceptron_forward.1} parent=0
    _
  %s6 = ssub.s32 1, %s4
  %s7 = scalar_select 0, %s6, %s4
  %8 = sst [smem:[#allocation2]] %s2
  $region1: #{perceptron_forward.1} parent=0
    #allocation3 [shape = 'u8[512]{0}', space=vmem, size = 0x400, scoped, tag = 'output window, operand 0, single buffered']
    #allocation4 [shape = 's32[1]{0}', space=sflag, size = 0x4, scoped, tag = 'scoped memory for perceptron_forward.1']
    %9 = vsyncpa [#allocation4], 0
    // Predicated region
    $region2: #{perceptron_forward.1} parent=1 // pred_check
      _
    $region3: #{perceptron_forward.1} parent=1 // pred_check_branch
      %11 = sbr.rel (0) target = $region5
    $region4: #{perceptron_forward.1} parent=1 // pred_region
      _
    $region5: #{perceptron_forward.1} parent=1 // pred_fallthru
      _
    // Predicated region
    $region6: #{perceptron_forward.1} parent=1 // pred_check
      _
    $region7: #{perceptron_forward.1} parent=1 // pred_check_branch
      %13 = sbr.rel (0) target = $region9
    $region8: #{perceptron_forward.1} parent=1 // pred_region
      _
    $region9: #{perceptron_forward.1} parent=1 // pred_fallthru
      _
    // Predicated region
    $region10: #{perceptron_forward.1} parent=1 // pred_check
      _
    $region11: #{perceptron_forward.1} parent=1 // pred_check_branch
      %15 = sbr.rel (0) target = $region13
    $region12: #{perceptron_forward.1} parent=1 // pred_region
      _
    $region13: #{perceptron_forward.1} parent=1 // pred_fallthru
      _
    %v16 = vld [vmem:[%s1] sm:$0xff]
    %v17 = vld [vmem:[%s0] sm:$0x3]
    %vm18 = vcmask 261120
    %v20 = vsel %vm18, %v16, 0
    %v23 = vsel %vm18, %v17, 0
    %25 = vmatprep.subr.mxu0 0.0
    %26 = vmatpush1.xpose.msra.mxu0 %v23
    %27 = vmatprep.subr.mxu0 0.0
    %28 = vmatpush1.xpose.msra.mxu0 0.0
    %29 = vmatprep.subr.mxu0 0.0
    %30 = vmatpush1.xpose.msra.mxu0 0.0
    %31 = vmatprep.subr.mxu0 0.0
    %32 = vmatpush1.xpose.msra.mxu0 0.0
    %33 = vmatprep.subr.mxu0 0.0
    %34 = vmatpush1.xpose.msra.mxu0 0.0
    %35 = vmatprep.subr.mxu0 0.0
    %36 = vmatpush1.xpose.msra.mxu0 0.0
    %37 = vmatprep.subr.mxu0 0.0
    %38 = vmatpush1.xpose.msra.mxu0 0.0
    %39 = vmatprep.subr.mxu0 0.0
    %40 = vmatpush1.xpose.msra.mxu0 0.0
    %41 = vmatprep.subr.mxu0 0.0
    %42 = vmatpush1.xpose.msra.mxu0 0.0
    %43 = vmatprep.subr.mxu0 0.0
    %44 = vmatpush1.xpose.msra.mxu0 0.0
    %45 = vmatprep.subr.mxu0 0.0
    %46 = vmatpush1.xpose.msra.mxu0 0.0
    %47 = vmatprep.subr.mxu0 0.0
    %48 = vmatpush1.xpose.msra.mxu0 0.0
    %49 = vmatprep.subr.mxu0 0.0
    %50 = vmatpush1.xpose.msra.mxu0 0.0
    %51 = vmatprep.subr.mxu0 0.0
    %52 = vmatpush1.xpose.msra.mxu0 0.0
    %53 = vmatprep.subr.mxu0 0.0
    %54 = vmatpush1.xpose.msra.mxu0 0.0
    %55 = vmatprep.subr.mxu0 0.0
    %56 = vmatpush1.xpose.msra.mxu0 0.0
    %57 = vmatprep.subr.mxu0 0.0
    %58 = vmatpush1.xpose.msra.mxu0 0.0
    %59 = vmatprep.subr.mxu0 0.0
    %60 = vmatpush1.xpose.msra.mxu0 0.0
    %61 = vmatprep.subr.mxu0 0.0
    %62 = vmatpush1.xpose.msra.mxu0 0.0
    %63 = vmatprep.subr.mxu0 0.0
    %64 = vmatpush1.xpose.msra.mxu0 0.0
    %65 = vmatprep.subr.mxu0 0.0
    %66 = vmatpush1.xpose.msra.mxu0 0.0
    %67 = vmatprep.subr.mxu0 0.0
    %68 = vmatpush1.xpose.msra.mxu0 0.0
    %69 = vmatprep.subr.mxu0 0.0
    %70 = vmatpush1.xpose.msra.mxu0 0.0
    %71 = vmatprep.subr.mxu0 0.0
    %72 = vmatpush1.xpose.msra.mxu0 0.0
    %73 = vmatprep.subr.mxu0 0.0
    %74 = vmatpush1.xpose.msra.mxu0 0.0
    %75 = vmatprep.subr.mxu0 0.0
    %76 = vmatpush1.xpose.msra.mxu0 0.0
    %77 = vmatprep.subr.mxu0 0.0
    %78 = vmatpush1.xpose.msra.mxu0 0.0
    %79 = vmatprep.subr.mxu0 0.0
    %80 = vmatpush1.xpose.msra.mxu0 0.0
    %81 = vmatprep.subr.mxu0 0.0
    %82 = vmatpush1.xpose.msra.mxu0 0.0
    %83 = vmatprep.subr.mxu0 0.0
    %84 = vmatpush1.xpose.msra.mxu0 0.0
    %85 = vmatprep.subr.mxu0 0.0
    %86 = vmatpush1.xpose.msra.mxu0 0.0
    %87 = vmatprep.subr.mxu0 0.0
    %88 = vmatpush1.xpose.msra.mxu0 0.0
    %89 = vmatprep.mubr.f32.mxu0 0.0
    %90 = vmatmul.mubr.f32.gmra.mrb[0].mxu0 %v20
    %v91 = vpop.f32.mrb[0].mxu0
    %v92 = vadd.f32 0.0, %v91
    %v93 = vpop.f32.mrb[0].mxu0
    %94 = vdwg.mxu0
    %s95 = sld [smem:[#allocation2]]
    %v96 = vstv %s95
    %v97 = vadd.f32 %v92, %v96
    %v98 = vxor.u32 %v97, 2147483648
    %v99 = vmul.f32 %v98, 1.442695
    %v100 = vpow.pop %v99
    %v101 = vadd.f32 %v100, 1.0
    %v102 = vrcp.pop %v101
    %v103 = vmul.f32 1.0, %v102
    %vm104 = vcmask 8192
    %105 = vst.msk [vmem:[#allocation3] sm:$0x1] %vm104, %v103
    // Predicated region
    $region14: #{perceptron_forward.1} parent=1 // pred_check
      _
    $region15: #{perceptron_forward.1} parent=1 // pred_check_branch
      %107 = sbr.rel (0) target = $region17
    $region16: #{perceptron_forward.1} parent=1 // pred_region
      %s109 = ssub.s32 16, 16
      %110 = vsyncadd [#allocation4], %s109
      %s112 = sshll.u32 [#allocation3], 4
      %s113 = int_to_ptr.vmem [resolvable:$true] %s112
      %115 = dma.vmem_to_hbm [thread:$0]  %s113, 16, %s3, [#allocation4]
    $region17: #{perceptron_forward.1} parent=1 // pred_fallthru
      _
    // Predicated region
    $region18: #{perceptron_forward.1} parent=1 // pred_check
      _
    $region19: #{perceptron_forward.1} parent=1 // pred_check_branch
      %117 = sbr.rel (0) target = $region21
    $region20: #{perceptron_forward.1} parent=1 // pred_region
      %118 = dma.done [#allocation4], 16
    $region21: #{perceptron_forward.1} parent=1 // pred_fallthru
      _
    %119 = vsyncpa [#allocation4], 1

</llo_original>
